<compile_context>
chip_gen: v7x
topology: tpu7x:2x2x1
jax: 0.10.0
libtpu: 0.0.40
codegen_flags: <defaults>
</compile_context>

<pallas_src>
import jax
import jax.numpy as jnp
from jax.experimental import pallas as pl
from jax.experimental.pallas import tpu as pltpu


# ---------------------------------------------------------------------------
# Small helpers
# ---------------------------------------------------------------------------
def _round_up(x, m):
    return ((x + m - 1) // m) * m


def _pick_tile(dim_padded, desired):
    """Largest multiple of 128 <= desired that divides dim_padded (a mult of 128)."""
    q = dim_padded // 128
    t_max = max(1, min(desired // 128, q))
    for t in range(t_max, 0, -1):
        if q % t == 0:
            return 128 * t
    return 128


def _vmem_capacity_bytes():
    """Physical VMEM per core; conservative 64 MiB fallback (v7x-safe)."""
    try:
        info = pltpu.get_tpu_info()
        for attr in ("vmem_capacity_bytes", "vmem_bytes", "vmem_size_bytes"):
            v = getattr(info, attr, None)
            if v:
                return int(v)
    except Exception:
        pass
    return 64 * 1024 * 1024


def _pad_cast(a, padded_shape, dtype):
    """Zero-pad to padded_shape and cast; both skipped when they are no-ops."""
    pads = tuple((0, p - s) for s, p in zip(a.shape, padded_shape))
    if any(hi for _, hi in pads):
        a = jnp.pad(a, pads)
    if a.dtype != jnp.dtype(dtype):
        a = a.astype(dtype)
    return a


def _fit_tiles(tm, tn, tk, dim_m, dim_n, dim_k, a_bytes, b_bytes, o_bytes, budget):
    """Shrink tk, then tm, then tn until the double-buffered set fits `budget`."""
    def cost(tm_, tn_, tk_):
        return (2 * (tm_ * tk_ * a_bytes + tk_ * tn_ * b_bytes
                     + tm_ * tn_ * o_bytes + tn_ * 4)
                + tm_ * tn_ * 4)                       # f32 accumulator scratch
    while cost(tm, tn, tk) > budget:
        if tk > 128:
            tk = _pick_tile(dim_k, tk // 2)
        elif tm > 128:
            tm = _pick_tile(dim_m, tm // 2)
        elif tn > 128:
            tn = _pick_tile(dim_n, tn // 2)            # last resort: re-streams adj
        else:
            break
    return tm, tn, tk


# ---------------------------------------------------------------------------
# Kernels
# ---------------------------------------------------------------------------
def _matmul_kernel(a_ref, b_ref, o_ref, acc_ref):
    """o[i,j] = sum_k a[i,k] @ b[k,j]; f32 accumulation, cast+store at last k."""
    @pl.when(pl.program_id(2) == 0)
    def _():
        acc_ref[...] = jnp.zeros_like(acc_ref)

    acc_ref[...] += jnp.dot(a_ref[...], b_ref[...],
                            preferred_element_type=jnp.float32)

    @pl.when(pl.program_id(2) == pl.num_programs(2) - 1)
    def _():
        o_ref[...] = acc_ref[...].astype(o_ref.dtype)


def _matmul_bias_kernel(a_ref, b_ref, bias_ref, o_ref, acc_ref):
    """o[i,j] = bias[j] + sum_k a[i,k] @ b[k,j]; f32 acc, cast+store at last k."""
    @pl.when(pl.program_id(2) == 0)
    def _():
        acc_ref[...] = jnp.broadcast_to(bias_ref[...].astype(jnp.float32),
                                        acc_ref.shape)

    acc_ref[...] += jnp.dot(a_ref[...], b_ref[...],
                            preferred_element_type=jnp.float32)

    @pl.when(pl.program_id(2) == pl.num_programs(2) - 1)
    def _():
        o_ref[...] = acc_ref[...].astype(o_ref.dtype)


def _tiled_matmul(a, b, bias_row, out_dtype, tm, tn, tk, vmem_limit,
                  flops, bytes_accessed):
    """Generic tiled (M,K)@(K,N) [+ bias] on the MXU with a resident f32 acc."""
    M, K = a.shape
    _, N = b.shape
    grid = (M // tm, N // tn, K // tk)

    in_specs = [pl.BlockSpec((tm, tk), lambda i, j, k: (i, k)),
                pl.BlockSpec((tk, tn), lambda i, j, k: (k, j))]
    operands = [a, b]
    kernel = _matmul_kernel
    if bias_row is not None:
        in_specs.append(pl.BlockSpec((1, tn), lambda i, j, k: (0, j)))
        operands.append(bias_row)
        kernel = _matmul_bias_kernel

    return pl.pallas_call(
        kernel,
        out_shape=jax.ShapeDtypeStruct((M, N), out_dtype),
        grid_spec=pltpu.PrefetchScalarGridSpec(
            num_scalar_prefetch=0,
            grid=grid,
            in_specs=in_specs,
            out_specs=pl.BlockSpec((tm, tn), lambda i, j, k: (i, j)),
            scratch_shapes=[pltpu.VMEM((tm, tn), jnp.float32)],
        ),
        compiler_params=pltpu.CompilerParams(
            dimension_semantics=("parallel", "parallel", "arbitrary"),
            vmem_limit_bytes=vmem_limit,
        ),
        cost_estimate=pl.CostEstimate(
            flops=int(flops), transcendentals=0, bytes_accessed=int(bytes_accessed)),
    )(*operands)


# ---------------------------------------------------------------------------
# Forward wrapper (matches GraphConvolution.forward)
# ---------------------------------------------------------------------------
def gcn_forward(x, adj, weight, bias=None, *, compute_dtype=jnp.bfloat16,
                out_dtype=None):
    """output = adj @ (x @ weight) + bias."""
    N, F_in = x.shape
    assert adj.shape == (N, N), adj.shape
    F_in2, F_out = weight.shape
    assert F_in2 == F_in

    if out_dtype is None:
        out_dtype = x.dtype

    # Pad only to multiples of 128 (never to tm/tk); padding is exact (zeros).
    Np = _round_up(N, 128)
    Fi = _round_up(F_in, 128)
    Fo = _round_up(F_out, 128)

    cbytes = jnp.dtype(compute_dtype).itemsize
    obytes = jnp.dtype(out_dtype).itemsize

    # Generation-aware budgets (v5e/v6e: 128 MiB VMEM; v7x: 64 MiB).
    big_vmem = _vmem_capacity_bytes() >= 100 * 1024 * 1024
    vmem_limit = (96 if big_vmem else 48) * 1024 * 1024
    budget = int(0.70 * vmem_limit)
    tm_des = 512 if big_vmem else 256
    tk_des = 1024 if big_vmem else 512

    # Operand prep (pad/cast skipped when already aligned & in compute_dtype).
    adj_p = _pad_cast(adj, (Np, Np), compute_dtype)
    x_p = _pad_cast(x, (Np, Fi), compute_dtype)
    w_p = _pad_cast(weight, (Fi, Fo), compute_dtype)
    if bias is None:
        b_p = jnp.zeros((1, Fo), jnp.float32)
    else:
        b_p = _pad_cast(bias.reshape(1, F_out), (1, Fo), jnp.float32)

    # ---- kernel 1: support = x @ W  (small; kept in compute_dtype) ----------
    tm1 = _pick_tile(Np, tm_des)
    tn1 = Fo
    tk1 = _pick_tile(Fi, tk_des)
    if (Np // tm1) * (Fo // tn1) < 2 and Np >= 256:
        tm1 = _pick_tile(Np, tm1 // 2)         # >=2 parallel blocks (v7x 2 TCs)
    tm1, tn1, tk1 = _fit_tiles(tm1, tn1, tk1, Np, Fo, Fi,
                               cbytes, cbytes, cbytes, budget)
    support_p = _tiled_matmul(
        x_p, w_p, None, compute_dtype, tm1, tn1, tk1, vmem_limit,
        flops=2 * Np * Fi * Fo,
        bytes_accessed=(Np * Fi + Fi * Fo + Np * Fo) * cbytes)

    # ---- kernel 2: out = adj @ support + bias  (dominant O(N^2) matmul) -----
    tn2 = Fo                                   # single j block -> adj streamed once
    tm2 = _pick_tile(Np, tm_des)
    tk2 = _pick_tile(Np, tk_des)
    if (Np // tm2) * (Fo // tn2) < 2 and Np >= 256:
        tm2 = _pick_tile(Np, tm2 // 2)         # keep both v7x TensorCores busy
    tm2, tn2, tk2 = _fit_tiles(tm2, tn2, tk2, Np, Fo, Np,
                               cbytes, cbytes, obytes, budget)
    out_p = _tiled_matmul(
        adj_p, support_p, b_p, out_dtype, tm2, tn2, tk2, vmem_limit,
        flops=2 * Np * Np * Fo,
        bytes_accessed=(Np * Np * cbytes + Np * Fo * cbytes
                        + Np * Fo * obytes + Fo * 4))

    return out_p[:N, :F_out]


graph_convolution = jax.jit(
    gcn_forward, static_argnames=("compute_dtype", "out_dtype"))


def init_graph_convolution_params(key, in_features, out_features, use_bias=True):
    """Matches GraphConvolution.reset_parameters: U(-stdv, stdv), stdv=1/sqrt(out)."""
    stdv = 1.0 / jnp.sqrt(jnp.float32(out_features))
    kw, kb = jax.random.split(key)
    weight = jax.random.uniform(kw, (in_features, out_features),
                                dtype=jnp.float32, minval=-stdv, maxval=stdv)
    bias = (jax.random.uniform(kb, (out_features,), dtype=jnp.float32,
                               minval=-stdv, maxval=stdv)
            if use_bias else None)
    return weight, bias


# ---------------------------------------------------------------------------
# Demo / check
# ---------------------------------------------------------------------------
if __name__ == "__main__":
    # Deliberately NOT multiples of 128 to exercise the padded/edge-tile path.
    N = 200        # number of graph nodes
    IN_F = 96      # in_features
    OUT_F = 64     # out_features

    key = jax.random.PRNGKey(0)
    k_in, k_adj, k_param = jax.random.split(key, 3)

    x = jax.random.normal(k_in, (N, IN_F), dtype=jnp.float32)
    adj = jax.random.uniform(k_adj, (N, N), dtype=jnp.float32)
    # symmetric, row-normalized adjacency (deterministic data)
    adj = (adj + adj.T) * 0.5
    adj = adj / jnp.sum(adj, axis=1, keepdims=True)

    weight, bias = init_graph_convolution_params(k_param, IN_F, OUT_F, use_bias=True)

    ref = adj @ (x @ weight) + bias

    # exact f32 path
    out_f32 = jax.block_until_ready(
        graph_convolution(x, adj, weight, bias, compute_dtype=jnp.float32))
    assert out_f32.shape == (N, OUT_F)
    assert jnp.allclose(out_f32, ref, atol=1e-4, rtol=1e-4), \
        f"f32 max abs err {jnp.max(jnp.abs(out_f32 - ref))}"

    # bias=None path (module supports bias=False)
    out_nb = jax.block_until_ready(
        graph_convolution(x, adj, weight, None, compute_dtype=jnp.float32))
    ref_nb = adj @ (x @ weight)
    assert jnp.allclose(out_nb, ref_nb, atol=1e-4, rtol=1e-4), \
        f"no-bias max abs err {jnp.max(jnp.abs(out_nb - ref_nb))}"

    # default bf16-operand / f32-accumulate path (halves adj HBM traffic)
    out_bf16 = jax.block_until_ready(graph_convolution(x, adj, weight, bias))
    assert out_bf16.dtype == x.dtype
    assert jnp.allclose(out_bf16, ref, atol=5e-2, rtol=5e-2), \
        f"bf16 max abs err {jnp.max(jnp.abs(out_bf16 - ref))}"

    print("KERNEL_OK")
</pallas_src>

<mosaic_0001>
module attributes {stable_mosaic.version = 11 : i64} {
  func.func @_matmul_bias_kernel(%arg0: i32, %arg1: i32, %arg2: i32, %arg3: memref<128x256xf32, #tpu.memory_space<vmem>>, %arg4: memref<256x128xf32, #tpu.memory_space<vmem>>, %arg5: memref<1x128xf32, #tpu.memory_space<vmem>>, %arg6: memref<128x128xf32, #tpu.memory_space<vmem>>, %arg7: memref<128x128xf32, #tpu.memory_space<vmem>>) attributes {dimension_semantics = [#tpu.dimension_semantics<parallel>, #tpu.dimension_semantics<parallel>, #tpu.dimension_semantics<arbitrary>], iteration_bounds = array<i64: 2, 1, 1>, scalar_prefetch = 0 : i64, scratch_operands = 1 : i64, tpu.core_type = #tpu.core_type<tc>, window_params = [{transform_indices = @transform_0, window_bounds = array<i64: 128, 256>}, {transform_indices = @transform_1, window_bounds = array<i64: 256, 128>}, {transform_indices = @transform_2, window_bounds = array<i64: 1, 128>}, {transform_indices = @transform_3, window_bounds = array<i64: 128, 128>}]} {
    %c0_i32 = arith.constant 0 : i32
    %0 = arith.cmpi eq, %arg2, %c0_i32 : i32
    %1 = arith.extui %0 : i1 to i32
    %c0_i32_0 = arith.constant 0 : i32
    %2 = arith.cmpi ne, %1, %c0_i32_0 : i32
    scf.if %2 {
      %c0_10 = arith.constant 0 : index
      %c0_11 = arith.constant 0 : index
      %12 = vector.load %arg5[%c0_10, %c0_11] : memref<1x128xf32, #tpu.memory_space<vmem>>, vector<1x128xf32>
      %13 = vector.shape_cast %12 : vector<1x128xf32> to vector<1x128xf32>
      %14 = vector.broadcast %13 : vector<1x128xf32> to vector<128x128xf32>
      %c0_12 = arith.constant 0 : index
      %c0_13 = arith.constant 0 : index
      %15 = vector.load %arg7[%c0_12, %c0_13] : memref<128x128xf32, #tpu.memory_space<vmem>>, vector<128x128xf32>
      tpu.vector_store %arg7[%c0_12, %c0_13], %14 {strides = array<i32>} : memref<128x128xf32, #tpu.memory_space<vmem>>, vector<128x128xf32>,
    } else {
    }
    %c0 = arith.constant 0 : index
    %c0_1 = arith.constant 0 : index
    %3 = vector.load %arg7[%c0, %c0_1] : memref<128x128xf32, #tpu.memory_space<vmem>>, vector<128x128xf32>
    %c0_2 = arith.constant 0 : index
    %c0_3 = arith.constant 0 : index
    %4 = vector.load %arg3[%c0_2, %c0_3] : memref<128x256xf32, #tpu.memory_space<vmem>>, vector<128x256xf32>
    %c0_4 = arith.constant 0 : index
    %c0_5 = arith.constant 0 : index
    %5 = vector.load %arg4[%c0_4, %c0_5] : memref<256x128xf32, #tpu.memory_space<vmem>>, vector<256x128xf32>
    %cst = arith.constant dense<0.000000e+00> : vector<128x128xf32>
    %6 = tpu.matmul %4, %5, %cst {dimension_numbers = #tpu.dot_dimension_numbers<[1], [0], [0], [1], [0, 0, 1, 1], [], []>} : vector<128x256xf32>, vector<256x128xf32>, vector<128x128xf32> -> vector<128x128xf32>
    %7 = arith.addf %3, %6 : vector<128x128xf32>
    %c0_6 = arith.constant 0 : index
    %c0_7 = arith.constant 0 : index
    %8 = vector.load %arg7[%c0_6, %c0_7] : memref<128x128xf32, #tpu.memory_space<vmem>>, vector<128x128xf32>
    tpu.vector_store %arg7[%c0_6, %c0_7], %7 {strides = array<i32>} : memref<128x128xf32, #tpu.memory_space<vmem>>, vector<128x128xf32>,
    %c0_i32_8 = arith.constant 0 : i32
    %9 = arith.cmpi eq, %arg2, %c0_i32_8 : i32
    %10 = arith.extui %9 : i1 to i32
    %c0_i32_9 = arith.constant 0 : i32
    %11 = arith.cmpi ne, %10, %c0_i32_9 : i32
    scf.if %11 {
      %c0_10 = arith.constant 0 : index
      %c0_11 = arith.constant 0 : index
      %12 = vector.load %arg7[%c0_10, %c0_11] : memref<128x128xf32, #tpu.memory_space<vmem>>, vector<128x128xf32>
      %c0_12 = arith.constant 0 : index
      %c0_13 = arith.constant 0 : index
      %13 = vector.load %arg6[%c0_12, %c0_13] : memref<128x128xf32, #tpu.memory_space<vmem>>, vector<128x128xf32>
      tpu.vector_store %arg6[%c0_12, %c0_13], %12 {strides = array<i32>} : memref<128x128xf32, #tpu.memory_space<vmem>>, vector<128x128xf32>,
    } else {
    }
    return
  }
  func.func @transform_0(%arg0: i32, %arg1: i32, %arg2: i32) -> (i32, i32) {
    %c0_i32 = arith.constant 0 : i32
    return %arg0, %arg2 : i32, i32
  }
  func.func @transform_1(%arg0: i32, %arg1: i32, %arg2: i32) -> (i32, i32) {
    %c0_i32 = arith.constant 0 : i32
    return %arg2, %arg1 : i32, i32
  }
  func.func @transform_2(%arg0: i32, %arg1: i32, %arg2: i32) -> (i32, i32) {
    %c0_i32 = arith.constant 0 : i32
    %c0_i32_0 = arith.constant 0 : i32
    return %c0_i32, %arg1 : i32, i32
  }
  func.func @transform_3(%arg0: i32, %arg1: i32, %arg2: i32) -> (i32, i32) {
    %c0_i32 = arith.constant 0 : i32
    return %arg0, %arg1 : i32, i32
  }
}

module attributes {stable_mosaic.version = 11 : i64} {
  func.func @_matmul_kernel(%arg0: i32, %arg1: i32, %arg2: i32, %arg3: memref<128x128xf32, #tpu.memory_space<vmem>>, %arg4: memref<128x128xf32, #tpu.memory_space<vmem>>, %arg5: memref<128x128xf32, #tpu.memory_space<vmem>>, %arg6: memref<128x128xf32, #tpu.memory_space<vmem>>) attributes {dimension_semantics = [#tpu.dimension_semantics<parallel>, #tpu.dimension_semantics<parallel>, #tpu.dimension_semantics<arbitrary>], iteration_bounds = array<i64: 2, 1, 1>, scalar_prefetch = 0 : i64, scratch_operands = 1 : i64, tpu.core_type = #tpu.core_type<tc>, window_params = [{transform_indices = @transform_0, window_bounds = array<i64: 128, 128>}, {transform_indices = @transform_1, window_bounds = array<i64: 128, 128>}, {transform_indices = @transform_2, window_bounds = array<i64: 128, 128>}]} {
    %c0_i32 = arith.constant 0 : i32
    %0 = arith.cmpi eq, %arg2, %c0_i32 : i32
    %1 = arith.extui %0 : i1 to i32
    %c0_i32_0 = arith.constant 0 : i32
    %2 = arith.cmpi ne, %1, %c0_i32_0 : i32
    scf.if %2 {
      %cst_10 = arith.constant 0.000000e+00 : f32
      %12 = vector.broadcast %cst_10 : f32 to vector<128x128xf32>
      %c0_11 = arith.constant 0 : index
      %c0_12 = arith.constant 0 : index
      %13 = vector.load %arg6[%c0_11, %c0_12] : memref<128x128xf32, #tpu.memory_space<vmem>>, vector<128x128xf32>
      tpu.vector_store %arg6[%c0_11, %c0_12], %12 {strides = array<i32>} : memref<128x128xf32, #tpu.memory_space<vmem>>, vector<128x128xf32>,
    } else {
    }
    %c0 = arith.constant 0 : index
    %c0_1 = arith.constant 0 : index
    %3 = vector.load %arg6[%c0, %c0_1] : memref<128x128xf32, #tpu.memory_space<vmem>>, vector<128x128xf32>
    %c0_2 = arith.constant 0 : index
    %c0_3 = arith.constant 0 : index
    %4 = vector.load %arg3[%c0_2, %c0_3] : memref<128x128xf32, #tpu.memory_space<vmem>>, vector<128x128xf32>
    %c0_4 = arith.constant 0 : index
    %c0_5 = arith.constant 0 : index
    %5 = vector.load %arg4[%c0_4, %c0_5] : memref<128x128xf32, #tpu.memory_space<vmem>>, vector<128x128xf32>
    %cst = arith.constant dense<0.000000e+00> : vector<128x128xf32>
    %6 = tpu.matmul %4, %5, %cst {dimension_numbers = #tpu.dot_dimension_numbers<[1], [0], [0], [1], [0, 0, 1, 1], [], []>} : vector<128x128xf32>, vector<128x128xf32>, vector<128x128xf32> -> vector<128x128xf32>
    %7 = arith.addf %3, %6 : vector<128x128xf32>
    %c0_6 = arith.constant 0 : index
    %c0_7 = arith.constant 0 : index
    %8 = vector.load %arg6[%c0_6, %c0_7] : memref<128x128xf32, #tpu.memory_space<vmem>>, vector<128x128xf32>
    tpu.vector_store %arg6[%c0_6, %c0_7], %7 {strides = array<i32>} : memref<128x128xf32, #tpu.memory_space<vmem>>, vector<128x128xf32>,
    %c0_i32_8 = arith.constant 0 : i32
    %9 = arith.cmpi eq, %arg2, %c0_i32_8 : i32
    %10 = arith.extui %9 : i1 to i32
    %c0_i32_9 = arith.constant 0 : i32
    %11 = arith.cmpi ne, %10, %c0_i32_9 : i32
    scf.if %11 {
      %c0_10 = arith.constant 0 : index
      %c0_11 = arith.constant 0 : index
      %12 = vector.load %arg6[%c0_10, %c0_11] : memref<128x128xf32, #tpu.memory_space<vmem>>, vector<128x128xf32>
      %c0_12 = arith.constant 0 : index
      %c0_13 = arith.constant 0 : index
      %13 = vector.load %arg5[%c0_12, %c0_13] : memref<128x128xf32, #tpu.memory_space<vmem>>, vector<128x128xf32>
      tpu.vector_store %arg5[%c0_12, %c0_13], %12 {strides = array<i32>} : memref<128x128xf32, #tpu.memory_space<vmem>>, vector<128x128xf32>,
    } else {
    }
    return
  }
  func.func @transform_0(%arg0: i32, %arg1: i32, %arg2: i32) -> (i32, i32) {
    %c0_i32 = arith.constant 0 : i32
    return %arg0, %arg2 : i32, i32
  }
  func.func @transform_1(%arg0: i32, %arg1: i32, %arg2: i32) -> (i32, i32) {
    %c0_i32 = arith.constant 0 : i32
    return %arg2, %arg1 : i32, i32
  }
  func.func @transform_2(%arg0: i32, %arg1: i32, %arg2: i32) -> (i32, i32) {
    %c0_i32 = arith.constant 0 : i32
    return %arg0, %arg1 : i32, i32
  }
}

</mosaic_0001>

<llo_original>
// kernel: gcn_forward.3
$region0: #{gcn_forward.3}
  #allocation0 [shape = 'u32[]', space=smem, size = 0x4, offset = 0x4, fixed_abs, tag = 'smem constant byte address 0x4 - core index']
  #allocation1 [shape = 'u32[144,128]{1,0:T(1,128)}', space=vmem, size = 0x12000, scoped, tag = 'internal scratch']
  #allocation2 [shape = 'f32[128,128]{1,0:T(8,128)}', space=vmem, size = 0x10000, scoped, tag = 'scratch operand']
  %s0 = inlined_call_operand.vmem [shape: f32[256,256], index: 0, kind: input, shape index: {}]
  %s1 = inlined_call_operand.vmem [shape: f32[256,128], index: 1, kind: input, shape index: {}]
  %s2 = inlined_call_operand.vmem [shape: f32[1,128], index: 2, kind: input, shape index: {}]
  %s3 = inlined_call_operand.vmem [shape: f32[256,128], index: 3, kind: output, shape index: {}]
  %s4 = sld [smem:[#allocation0]]
  $region53: #{gcn_forward.3} parent=0
    _
  %s6 = ssub.s32 1, %s4
  %s7 = scalar_select 0, %s6, %s4
  loop: start=0, step=1, limit=4
  $region2: #{gcn_forward.3} parent=0 // loop_pre_header
    _
  $region3: #{gcn_forward.3} parent=0 // loop_header
    %s9 = sphi 0, %s13
    %p10 = scmp.ge.s32.totalorder %s9, 4
    %s16 = sphi 0, %s35
    %s17 = sphi 0, %s31
    %s18 = sphi 0, %s27
    %s19 = sphi 0, %s16
    %s20 = sphi 0, %s17
    %s21 = sphi 0, %s18
    %s22 = sphi 0, %s19
    %s23 = sphi 0, %s20
    %s24 = sphi 0, %s21
    %s40 = sphi 0, %s42
    %s43 = sphi 0, %s40
    %s44 = sphi 0, %s43
    %s60 = sphi 0, %s44
    %s68 = sphi 0, %s70
    %s71 = sphi 0, %s68
    %s72 = sphi 0, %s71
    %s88 = sphi 0, %s72
    %s94 = sphi 0, %s96
    %s97 = sphi 0, %s94
    %s98 = sphi 0, %s97
    %s114 = sphi 0, %s98
    %s122 = sphi 0, %s124
    %s125 = sphi 0, %s122
    %s126 = sphi 0, %s125
    %s142 = sphi 0, %s126
  $region4: #{gcn_forward.3} parent=0 // loop_header_branch
    %12 = sbr.rel (%p10) target = $region8
  $region5: #{gcn_forward.3} parent=0 // loop_body
    %s14 = ssub.s32 %s9, 1
    %s15 = ssub.s32 %s9, 2
    %s25 = sadd.s32 1, %s18
    %p26 = scmp.ge.s32.totalorder %s25, 1
    %s27 = scalar_select %p26, 0, %s25
    %s28 = sadd.s32 1, %s17
    %s29 = scalar_select %p26, %s28, %s17
    %p30 = scmp.ge.s32.totalorder %s29, 1
    %s31 = scalar_select %p30, 0, %s29
    %s32 = sadd.s32 1, %s16
    %s33 = scalar_select %p30, %s32, %s16
    %p34 = scmp.ge.s32.totalorder %s33, 2
    %s35 = scalar_select %p34, 0, %s33
    %s36 = ssub.s32 %s16, %s35
    %s37 = ssub.s32 %s18, %s27
    %s38 = sor.u32 %s36, %s37
    %p39 = scmp.eq.s32.totalorder %s38, 0
    %s41 = sadd.s32 %s40, 1
    %s42 = scalar_select %p39, %s40, %s41
    %p45 = pneg %p39
    %p46 = scmp.eq.s32.totalorder %s9, 1
    %p47 = por %p45, %p46
    %p48 = scmp.ne.s32.totalorder %s40, %s43
    %p49 = scmp.eq.s32.totalorder %s9, 0
    %p50 = por %p48, %p49
    %p51 = scmp.ne.s32.totalorder %s40, %s43
    %p52 = scmp.eq.s32.totalorder %s14, 1
    %p53 = por %p51, %p52
    %p54 = scmp.ne.s32.totalorder %s43, %s44
    %p55 = scmp.eq.s32.totalorder %s14, 0
    %p56 = por %p54, %p55
    %p57 = scmp.ne.s32.totalorder %s43, %s44
    %p58 = scmp.eq.s32.totalorder %s15, 1
    %p59 = por %p57, %p58
    %p61 = scmp.ne.s32.totalorder %s44, %s60
    %p62 = scmp.eq.s32.totalorder %s15, 0
    %p63 = por %p61, %p62
    %s64 = ssub.s32 %s18, %s27
    %s65 = ssub.s32 %s17, %s31
    %s66 = sor.u32 %s64, %s65
    %p67 = scmp.eq.s32.totalorder %s66, 0
    %s69 = sadd.s32 %s68, 1
    %s70 = scalar_select %p67, %s68, %s69
    %p73 = pneg %p67
    %p74 = scmp.eq.s32.totalorder %s9, 1
    %p75 = por %p73, %p74
    %p76 = scmp.ne.s32.totalorder %s68, %s71
    %p77 = scmp.eq.s32.totalorder %s9, 0
    %p78 = por %p76, %p77
    %p79 = scmp.ne.s32.totalorder %s68, %s71
    %p80 = scmp.eq.s32.totalorder %s14, 1
    %p81 = por %p79, %p80
    %p82 = scmp.ne.s32.totalorder %s71, %s72
    %p83 = scmp.eq.s32.totalorder %s14, 0
    %p84 = por %p82, %p83
    %p85 = scmp.ne.s32.totalorder %s71, %s72
    %p86 = scmp.eq.s32.totalorder %s15, 1
    %p87 = por %p85, %p86
    %p89 = scmp.ne.s32.totalorder %s72, %s88
    %p90 = scmp.eq.s32.totalorder %s15, 0
    %p91 = por %p89, %p90
    %s92 = ssub.s32 %s17, %s31
    %p93 = scmp.eq.s32.totalorder %s92, 0
    %s95 = sadd.s32 %s94, 1
    %s96 = scalar_select %p93, %s94, %s95
    %p99 = pneg %p93
    %p100 = scmp.eq.s32.totalorder %s9, 1
    %p101 = por %p99, %p100
    %p102 = scmp.ne.s32.totalorder %s94, %s97
    %p103 = scmp.eq.s32.totalorder %s9, 0
    %p104 = por %p102, %p103
    %p105 = scmp.ne.s32.totalorder %s94, %s97
    %p106 = scmp.eq.s32.totalorder %s14, 1
    %p107 = por %p105, %p106
    %p108 = scmp.ne.s32.totalorder %s97, %s98
    %p109 = scmp.eq.s32.totalorder %s14, 0
    %p110 = por %p108, %p109
    %p111 = scmp.ne.s32.totalorder %s97, %s98
    %p112 = scmp.eq.s32.totalorder %s15, 1
    %p113 = por %p111, %p112
    %p115 = scmp.ne.s32.totalorder %s98, %s114
    %p116 = scmp.eq.s32.totalorder %s15, 0
    %p117 = por %p115, %p116
    %s118 = ssub.s32 %s16, %s35
    %s119 = ssub.s32 %s17, %s31
    %s120 = sor.u32 %s118, %s119
    %p121 = scmp.eq.s32.totalorder %s120, 0
    %s123 = sadd.s32 %s122, 1
    %s124 = scalar_select %p121, %s122, %s123
    %p127 = pneg %p121
    %p128 = scmp.eq.s32.totalorder %s9, 1
    %p129 = por %p127, %p128
    %p130 = scmp.ne.s32.totalorder %s122, %s125
    %p131 = scmp.eq.s32.totalorder %s9, 0
    %p132 = por %p130, %p131
    %p133 = scmp.ne.s32.totalorder %s122, %s125
    %p134 = scmp.eq.s32.totalorder %s14, 1
    %p135 = por %p133, %p134
    %p136 = scmp.ne.s32.totalorder %s125, %s126
    %p137 = scmp.eq.s32.totalorder %s14, 0
    %p138 = por %p136, %p137
    %p139 = scmp.ne.s32.totalorder %s125, %s126
    %p140 = scmp.eq.s32.totalorder %s15, 1
    %p141 = por %p139, %p140
    %p143 = scmp.ne.s32.totalorder %s126, %s142
    %p144 = scmp.eq.s32.totalorder %s15, 0
    %p145 = por %p143, %p144
    %p146 = scmp.le.s32.totalorder 1, %s9
    %p147 = scmp.lt.s32.totalorder %s9, 3
    %p148 = pnand %p146, %p147
    %p149 = pneg %p148
    // Predicated region
    $region9: #{gcn_forward.3} parent=5 // pred_check
      _
    $region10: #{gcn_forward.3} parent=5 // pred_check_branch
      %151 = sbr.rel (%p148) target = $region12
    $region11: #{gcn_forward.3} parent=5 // pred_region
      %s152 = ssub.s32 %s9, 1
      // Predicated region
      $region13: #{gcn_forward.3} parent=11 // pred_check
        %p153 = pneg %p84
      $region14: #{gcn_forward.3} parent=11 // pred_check_branch
        %155 = sbr.rel (%p153) target = $region16
      $region15: #{gcn_forward.3} parent=11 // pred_region
        %s156 = smul.u32 32, %s21
        %p157 = scmp.lt.s32.totalorder %s156, 31
        %s158 = scalar_select %p157, %s156, 31
        %p159 = scmp.lt.s32.totalorder %s20, 0
        %s160 = scalar_select %p159, %s20, 0
        %s161 = sadd.s32 %s160, %s158
        %s162 = smul.addr %s161, 8
        %s163 = scalar_lea.vmem %s1, %s162
        %s164 = smul.u32 32, %s21
      $region16: #{gcn_forward.3} parent=11 // pred_fallthru
        _
      // Predicated region
      $region17: #{gcn_forward.3} parent=11 // pred_check
        %p165 = pneg %p110
      $region18: #{gcn_forward.3} parent=11 // pred_check_branch
        %167 = sbr.rel (%p165) target = $region20
      $region19: #{gcn_forward.3} parent=11 // pred_region
        %p168 = scmp.lt.s32.totalorder %s20, 0
        %s169 = scalar_select %p168, %s20, 0
        %s170 = scalar_lea.vmem %s2, %s169
      $region20: #{gcn_forward.3} parent=11 // pred_fallthru
        _
    $region12: #{gcn_forward.3} parent=5 // pred_fallthru
      _
    %p171 = scmp.lt.s32.totalorder %s9, 2
    // Predicated region
    $region21: #{gcn_forward.3} parent=5 // pred_check
      %p172 = pneg %p171
    $region22: #{gcn_forward.3} parent=5 // pred_check_branch
      %174 = sbr.rel (%p172) target = $region24
    $region23: #{gcn_forward.3} parent=5 // pred_region
      // Predicated region
      $region25: #{gcn_forward.3} parent=23 // pred_check
        %p175 = pneg %p50
      $region26: #{gcn_forward.3} parent=23 // pred_check_branch
        %177 = sbr.rel (%p175) target = $region28
      $region27: #{gcn_forward.3} parent=23 // pred_region
        %s178 = smul.u32 16, %s16
        %s179 = smul.u32 2, %s18
        %p180 = scmp.lt.s32.totalorder %s178, 31
        %s181 = scalar_select %p180, %s178, 31
        %p182 = scmp.lt.s32.totalorder %s179, 1
        %s183 = scalar_select %p182, %s179, 1
        %s184 = smul.addr %s181, 2
        %s185 = sadd.s32 %s183, %s184
        %s186 = smul.addr %s185, 8
        %s187 = scalar_lea.vmem %s0, %s186
        %s188 = smul.u32 16, %s16
        %s189 = smul.u32 2, %s18
      $region28: #{gcn_forward.3} parent=23 // pred_fallthru
        _
    $region24: #{gcn_forward.3} parent=5 // pred_fallthru
      _
    %p190 = scmp.le.s32.totalorder 1, %s9
    %p191 = scmp.lt.s32.totalorder %s9, 3
    %p192 = pnand %p190, %p191
    %p193 = pneg %p192
    // Predicated region
    $region29: #{gcn_forward.3} parent=5 // pred_check
      _
    $region30: #{gcn_forward.3} parent=5 // pred_check_branch
      %195 = sbr.rel (%p192) target = $region32
    $region31: #{gcn_forward.3} parent=5 // pred_region
      %s196 = ssub.s32 %s9, 1
      %s197 = smul.u32 16, %s19
      %s198 = smul.u32 2, %s21
      %p199 = scmp.lt.s32.totalorder %s197, 31
      %s200 = scalar_select %p199, %s197, 31
      %p201 = scmp.lt.s32.totalorder %s198, 1
      %s202 = scalar_select %p201, %s198, 1
      %s203 = smul.addr %s200, 2
      %s204 = sadd.s32 %s202, %s203
      %s205 = smul.addr %s204, 8
      %s206 = scalar_lea.vmem %s0, %s205
      %p207 = pneg %p56
      %p208 = pneg %p53
      %s209 = smul.u32 32, %s21
      %p210 = scmp.lt.s32.totalorder %s209, 31
      %s211 = scalar_select %p210, %s209, 31
      %p212 = scmp.lt.s32.totalorder %s20, 0
      %s213 = scalar_select %p212, %s20, 0
      %s214 = sadd.s32 %s213, %s211
      %s215 = smul.addr %s214, 8
      %s216 = scalar_lea.vmem %s1, %s215
      %p217 = pneg %p84
      %p218 = pneg %p81
      %p219 = scmp.lt.s32.totalorder %s20, 0
      %s220 = scalar_select %p219, %s20, 0
      %s221 = scalar_lea.vmem %s2, %s220
      %p222 = pneg %p110
      %p223 = pneg %p107
      %p224 = pneg %p138
      %p225 = pneg %p135
      %s226 = smul.u32 16, %s19
      %p227 = scmp.lt.s32.totalorder %s226, 31
      %s228 = scalar_select %p227, %s226, 31
      %p229 = scmp.lt.s32.totalorder %s20, 0
      %s230 = scalar_select %p229, %s20, 0
      %s231 = sadd.s32 %s230, %s228
      %s232 = smul.addr %s231, 8
      %s233 = scalar_lea.vmem %s3, %s232
      %s234 = smul.u32 16, %s19
      %s235 = smul.u32 2, %s21
      %p236 = scmp.lt.s32.totalorder %s234, 31
      %s237 = scalar_select %p236, %s234, 31
      %p238 = scmp.lt.s32.totalorder %s235, 1
      %s239 = scalar_select %p238, %s235, 1
      %s240 = smul.addr %s237, 2
      %s241 = sadd.s32 %s239, %s240
      %s242 = smul.addr %s241, 8
      %s243 = scalar_lea.vmem %s0, %s242
      %s244 = smul.u32 16, %s19
      %s245 = smul.u32 2, %s21
      %s246 = smul.u32 32, %s21
      %p247 = scmp.lt.s32.totalorder %s246, 31
      %s248 = scalar_select %p247, %s246, 31
      %p249 = scmp.lt.s32.totalorder %s20, 0
      %s250 = scalar_select %p249, %s20, 0
      %s251 = sadd.s32 %s250, %s248
      %s252 = smul.addr %s251, 8
      %s253 = scalar_lea.vmem %s1, %s252
      %s254 = smul.u32 32, %s21
      %p255 = scmp.lt.s32.totalorder %s20, 0
      %s256 = scalar_select %p255, %s20, 0
      %s257 = scalar_lea.vmem %s2, %s256
      %s258 = smul.u32 16, %s19
      %p259 = scmp.lt.s32.totalorder %s258, 31
      %s260 = scalar_select %p259, %s258, 31
      %p261 = scmp.lt.s32.totalorder %s20, 0
      %s262 = scalar_select %p261, %s20, 0
      %s263 = sadd.s32 %s262, %s260
      %s264 = smul.addr %s263, 8
      %s265 = scalar_lea.vmem %s3, %s264
      %s266 = smul.u32 16, %s19
      %p267 = scmp.eq.s32.totalorder %s21, 0
      // Predicated region
      $region33: #{gcn_forward.3} parent=31 // pred_check
        %p268 = pneg %p267
      $region34: #{gcn_forward.3} parent=31 // pred_check_branch
        %270 = sbr.rel (%p268) target = $region36
      $region35: #{gcn_forward.3} parent=31 // pred_region
        %v271 = vld [vmem:[%s257] sm:$0x1]
        %v273 = vlaneseq
        %v274 = vshrl.u32 %v273, 7
        %v275 = vsub.s32 0, %v274
        %v276 = vrot.slane %v271, %v275
        %278 = vst [vmem:[#allocation2] sm:$0xff] %v276
        %279 = vst [vmem:[#allocation2 + $0x8] sm:$0xff] %v276
        %280 = vst [vmem:[#allocation2 + $0x10] sm:$0xff] %v276
        %281 = vst [vmem:[#allocation2 + $0x18] sm:$0xff] %v276
        %282 = vst [vmem:[#allocation2 + $0x20] sm:$0xff] %v276
        %283 = vst [vmem:[#allocation2 + $0x28] sm:$0xff] %v276
        %284 = vst [vmem:[#allocation2 + $0x30] sm:$0xff] %v276
        %285 = vst [vmem:[#allocation2 + $0x38] sm:$0xff] %v276
        %286 = vst [vmem:[#allocation2 + $0x40] sm:$0xff] %v276
        %287 = vst [vmem:[#allocation2 + $0x48] sm:$0xff] %v276
        %288 = vst [vmem:[#allocation2 + $0x50] sm:$0xff] %v276
        %289 = vst [vmem:[#allocation2 + $0x58] sm:$0xff] %v276
        %290 = vst [vmem:[#allocation2 + $0x60] sm:$0xff] %v276
        %291 = vst [vmem:[#allocation2 + $0x68] sm:$0xff] %v276
        %292 = vst [vmem:[#allocation2 + $0x70] sm:$0xff] %v276
        %293 = vst [vmem:[#allocation2 + $0x78] sm:$0xff] %v276
      $region36: #{gcn_forward.3} parent=31 // pred_fallthru
        _
      %v294 = vld [vmem:[#allocation2] sm:$0xff]
      %v295 = vld [vmem:[#allocation2 + $0x8] sm:$0xff]
      %v296 = vld [vmem:[#allocation2 + $0x10] sm:$0xff]
      %v297 = vld [vmem:[#allocation2 + $0x18] sm:$0xff]
      %v298 = vld [vmem:[#allocation2 + $0x20] sm:$0xff]
      %v299 = vld [vmem:[#allocation2 + $0x28] sm:$0xff]
      %v300 = vld [vmem:[#allocation2 + $0x30] sm:$0xff]
      %v301 = vld [vmem:[#allocation2 + $0x38] sm:$0xff]
      %v302 = vld [vmem:[#allocation2 + $0x40] sm:$0xff]
      %v303 = vld [vmem:[#allocation2 + $0x48] sm:$0xff]
      %v304 = vld [vmem:[#allocation2 + $0x50] sm:$0xff]
      %v305 = vld [vmem:[#allocation2 + $0x58] sm:$0xff]
      %v306 = vld [vmem:[#allocation2 + $0x60] sm:$0xff]
      %v307 = vld [vmem:[#allocation2 + $0x68] sm:$0xff]
      %v308 = vld [vmem:[#allocation2 + $0x70] sm:$0xff]
      %v309 = vld [vmem:[#allocation2 + $0x78] sm:$0xff]
      %v310 = vld [vmem:[%s243] sm:$0xff]
      %v311 = vld [vmem:[%s243 + $0x8] sm:$0xff]
      %v312 = vld [vmem:[%s243 + $0x10] sm:$0xff]
      %v313 = vld [vmem:[%s243 + $0x18] sm:$0xff]
      %v314 = vld [vmem:[%s243 + $0x20] sm:$0xff]
      %v315 = vld [vmem:[%s243 + $0x28] sm:$0xff]
      %v316 = vld [vmem:[%s243 + $0x30] sm:$0xff]
      %v317 = vld [vmem:[%s243 + $0x38] sm:$0xff]
      %v318 = vld [vmem:[%s243 + $0x40] sm:$0xff]
      %v319 = vld [vmem:[%s243 + $0x48] sm:$0xff]
      %v320 = vld [vmem:[%s243 + $0x50] sm:$0xff]
      %v321 = vld [vmem:[%s243 + $0x58] sm:$0xff]
      %v322 = vld [vmem:[%s243 + $0x60] sm:$0xff]
      %v323 = vld [vmem:[%s243 + $0x68] sm:$0xff]
      %v324 = vld [vmem:[%s243 + $0x70] sm:$0xff]
      %v325 = vld [vmem:[%s243 + $0x78] sm:$0xff]
      %v326 = vld [vmem:[%s243 + $0x80] sm:$0xff]
      %v327 = vld [vmem:[%s243 + $0x88] sm:$0xff]
      %v328 = vld [vmem:[%s243 + $0x90] sm:$0xff]
      %v329 = vld [vmem:[%s243 + $0x98] sm:$0xff]
      %v330 = vld [vmem:[%s243 + $0xa0] sm:$0xff]
      %v331 = vld [vmem:[%s243 + $0xa8] sm:$0xff]
      %v332 = vld [vmem:[%s243 + $0xb0] sm:$0xff]
      %v333 = vld [vmem:[%s243 + $0xb8] sm:$0xff]
      %v334 = vld [vmem:[%s243 + $0xc0] sm:$0xff]
      %v335 = vld [vmem:[%s243 + $0xc8] sm:$0xff]
      %v336 = vld [vmem:[%s243 + $0xd0] sm:$0xff]
      %v337 = vld [vmem:[%s243 + $0xd8] sm:$0xff]
      %v338 = vld [vmem:[%s243 + $0xe0] sm:$0xff]
      %v339 = vld [vmem:[%s243 + $0xe8] sm:$0xff]
      %v340 = vld [vmem:[%s243 + $0xf0] sm:$0xff]
      %v341 = vld [vmem:[%s243 + $0xf8] sm:$0xff]
      %v342 = vld [vmem:[%s253] sm:$0xff]
      %v343 = vld [vmem:[%s253 + $0x8] sm:$0xff]
      %v344 = vld [vmem:[%s253 + $0x10] sm:$0xff]
      %v345 = vld [vmem:[%s253 + $0x18] sm:$0xff]
      %v346 = vld [vmem:[%s253 + $0x20] sm:$0xff]
      %v347 = vld [vmem:[%s253 + $0x28] sm:$0xff]
      %v348 = vld [vmem:[%s253 + $0x30] sm:$0xff]
      %v349 = vld [vmem:[%s253 + $0x38] sm:$0xff]
      %v350 = vld [vmem:[%s253 + $0x40] sm:$0xff]
      %v351 = vld [vmem:[%s253 + $0x48] sm:$0xff]
      %v352 = vld [vmem:[%s253 + $0x50] sm:$0xff]
      %v353 = vld [vmem:[%s253 + $0x58] sm:$0xff]
      %v354 = vld [vmem:[%s253 + $0x60] sm:$0xff]
      %v355 = vld [vmem:[%s253 + $0x68] sm:$0xff]
      %v356 = vld [vmem:[%s253 + $0x70] sm:$0xff]
      %v357 = vld [vmem:[%s253 + $0x78] sm:$0xff]
      %v358 = vld [vmem:[%s253 + $0x80] sm:$0xff]
      %v359 = vld [vmem:[%s253 + $0x88] sm:$0xff]
      %v360 = vld [vmem:[%s253 + $0x90] sm:$0xff]
      %v361 = vld [vmem:[%s253 + $0x98] sm:$0xff]
      %v362 = vld [vmem:[%s253 + $0xa0] sm:$0xff]
      %v363 = vld [vmem:[%s253 + $0xa8] sm:$0xff]
      %v364 = vld [vmem:[%s253 + $0xb0] sm:$0xff]
      %v365 = vld [vmem:[%s253 + $0xb8] sm:$0xff]
      %v366 = vld [vmem:[%s253 + $0xc0] sm:$0xff]
      %v367 = vld [vmem:[%s253 + $0xc8] sm:$0xff]
      %v368 = vld [vmem:[%s253 + $0xd0] sm:$0xff]
      %v369 = vld [vmem:[%s253 + $0xd8] sm:$0xff]
      %v370 = vld [vmem:[%s253 + $0xe0] sm:$0xff]
      %v371 = vld [vmem:[%s253 + $0xe8] sm:$0xff]
      %v372 = vld [vmem:[%s253 + $0xf0] sm:$0xff]
      %v373 = vld [vmem:[%s253 + $0xf8] sm:$0xff]
      %374 = vmatprep.subr.mxu0 0.0
      %375 = vmatpush1.msra.mxu0 %v342
      %376 = vmatprep.subr.mxu0 0.0
      %377 = vmatpush1.msra.mxu0 %v343
      %378 = vmatprep.subr.mxu0 0.0
      %379 = vmatpush1.msra.mxu0 %v344
      %380 = vmatprep.subr.mxu0 0.0
      %381 = vmatpush1.msra.mxu0 %v345
      %382 = vmatprep.subr.mxu0 0.0
      %383 = vmatpush1.msra.mxu0 %v346
      %384 = vmatprep.subr.mxu0 0.0
      %385 = vmatpush1.msra.mxu0 %v347
      %386 = vmatprep.subr.mxu0 0.0
      %387 = vmatpush1.msra.mxu0 %v348
      %388 = vmatprep.subr.mxu0 0.0
      %389 = vmatpush1.msra.mxu0 %v349
      %390 = vmatprep.subr.mxu0 0.0
      %391 = vmatpush1.msra.mxu0 %v350
      %392 = vmatprep.subr.mxu0 0.0
      %393 = vmatpush1.msra.mxu0 %v351
      %394 = vmatprep.subr.mxu0 0.0
      %395 = vmatpush1.msra.mxu0 %v352
      %396 = vmatprep.subr.mxu0 0.0
      %397 = vmatpush1.msra.mxu0 %v353
      %398 = vmatprep.subr.mxu0 0.0
      %399 = vmatpush1.msra.mxu0 %v354
      %400 = vmatprep.subr.mxu0 0.0
      %401 = vmatpush1.msra.mxu0 %v355
      %402 = vmatprep.subr.mxu0 0.0
      %403 = vmatpush1.msra.mxu0 %v356
      %404 = vmatprep.subr.mxu0 0.0
      %405 = vmatpush1.msra.mxu0 %v357
      %406 = vmatprep.subr.mxu0 0.0
      %407 = vmatpush1.msra.mxu0 %v358
      %408 = vmatprep.subr.mxu0 0.0
      %409 = vmatpush1.msra.mxu0 %v359
      %410 = vmatprep.subr.mxu0 0.0
      %411 = vmatpush1.msra.mxu0 %v360
      %412 = vmatprep.subr.mxu0 0.0
      %413 = vmatpush1.msra.mxu0 %v361
      %414 = vmatprep.subr.mxu0 0.0
      %415 = vmatpush1.msra.mxu0 %v362
      %416 = vmatprep.subr.mxu0 0.0
      %417 = vmatpush1.msra.mxu0 %v363
      %418 = vmatprep.subr.mxu0 0.0
      %419 = vmatpush1.msra.mxu0 %v364
      %420 = vmatprep.subr.mxu0 0.0
      %421 = vmatpush1.msra.mxu0 %v365
      %422 = vmatprep.subr.mxu0 0.0
      %423 = vmatpush1.msra.mxu0 %v366
      %424 = vmatprep.subr.mxu0 0.0
      %425 = vmatpush1.msra.mxu0 %v367
      %426 = vmatprep.subr.mxu0 0.0
      %427 = vmatpush1.msra.mxu0 %v368
      %428 = vmatprep.subr.mxu0 0.0
      %429 = vmatpush1.msra.mxu0 %v369
      %430 = vmatprep.subr.mxu0 0.0
      %431 = vmatpush1.msra.mxu0 %v370
      %432 = vmatprep.subr.mxu0 0.0
      %433 = vmatpush1.msra.mxu0 %v371
      %434 = vmatprep.subr.mxu0 0.0
      %435 = vmatpush1.msra.mxu0 %v372
      %436 = vmatprep.subr.mxu0 0.0
      %437 = vmatpush1.msra.mxu0 %v373
      %438 = vmatprep.mubr.f32.mxu0 %v311
      %439 = vmatmul.mubr.f32.gmra.mrb[0].mxu0 %v310
      %v440 = vpop.f32.mrb[0].mxu0
      %v441 = vadd.f32 0.0, %v440
      %v442 = vpop.f32.mrb[0].mxu0
      %443 = vmatprep.mubr.f32.mxu0 %v313
      %444 = vmatmul.mubr.f32.gmra.mrb[0].mxu0 %v312
      %v445 = vpop.f32.mrb[0].mxu0
      %v446 = vadd.f32 0.0, %v445
      %v447 = vpop.f32.mrb[0].mxu0
      %448 = vmatprep.mubr.f32.mxu0 %v315
      %449 = vmatmul.mubr.f32.gmra.mrb[0].mxu0 %v314
      %v450 = vpop.f32.mrb[0].mxu0
      %v451 = vadd.f32 0.0, %v450
      %v452 = vpop.f32.mrb[0].mxu0
      %453 = vmatprep.mubr.f32.mxu0 %v317
      %454 = vmatmul.mubr.f32.gmra.mrb[0].mxu0 %v316
      %v455 = vpop.f32.mrb[0].mxu0
      %v456 = vadd.f32 0.0, %v455
      %v457 = vpop.f32.mrb[0].mxu0
      %458 = vmatprep.mubr.f32.mxu0 %v319
      %459 = vmatmul.mubr.f32.gmra.mrb[0].mxu0 %v318
      %v460 = vpop.f32.mrb[0].mxu0
      %v461 = vadd.f32 0.0, %v460
      %v462 = vpop.f32.mrb[0].mxu0
      %463 = vmatprep.mubr.f32.mxu0 %v321
      %464 = vmatmul.mubr.f32.gmra.mrb[0].mxu0 %v320
      %v465 = vpop.f32.mrb[0].mxu0
      %v466 = vadd.f32 0.0, %v465
      %v467 = vpop.f32.mrb[0].mxu0
      %468 = vmatprep.mubr.f32.mxu0 %v323
      %469 = vmatmul.mubr.f32.gmra.mrb[0].mxu0 %v322
      %v470 = vpop.f32.mrb[0].mxu0
      %v471 = vadd.f32 0.0, %v470
      %v472 = vpop.f32.mrb[0].mxu0
      %473 = vmatprep.mubr.f32.mxu0 %v325
      %474 = vmatmul.mubr.f32.gmra.mrb[0].mxu0 %v324
      %v475 = vpop.f32.mrb[0].mxu0
      %v476 = vadd.f32 0.0, %v475
      %v477 = vpop.f32.mrb[0].mxu0
      %478 = vmatprep.mubr.f32.mxu0 %v327
      %479 = vmatmul.mubr.f32.gmra.mrb[0].mxu0 %v326
      %v480 = vpop.f32.mrb[0].mxu0
      %v481 = vadd.f32 0.0, %v480
      %v482 = vpop.f32.mrb[0].mxu0
      %483 = vmatprep.mubr.f32.mxu0 %v329
      %484 = vmatmul.mubr.f32.gmra.mrb[0].mxu0 %v328
      %v485 = vpop.f32.mrb[0].mxu0
      %v486 = vadd.f32 0.0, %v485
      %v487 = vpop.f32.mrb[0].mxu0
      %488 = vmatprep.mubr.f32.mxu0 %v331
      %489 = vmatmul.mubr.f32.gmra.mrb[0].mxu0 %v330
      %v490 = vpop.f32.mrb[0].mxu0
      %v491 = vadd.f32 0.0, %v490
      %v492 = vpop.f32.mrb[0].mxu0
      %493 = vmatprep.mubr.f32.mxu0 %v333
      %494 = vmatmul.mubr.f32.gmra.mrb[0].mxu0 %v332
      %v495 = vpop.f32.mrb[0].mxu0
      %v496 = vadd.f32 0.0, %v495
      %v497 = vpop.f32.mrb[0].mxu0
      %498 = vmatprep.mubr.f32.mxu0 %v335
      %499 = vmatmul.mubr.f32.gmra.mrb[0].mxu0 %v334
      %v500 = vpop.f32.mrb[0].mxu0
      %v501 = vadd.f32 0.0, %v500
      %v502 = vpop.f32.mrb[0].mxu0
      %503 = vmatprep.mubr.f32.mxu0 %v337
      %504 = vmatmul.mubr.f32.gmra.mrb[0].mxu0 %v336
      %v505 = vpop.f32.mrb[0].mxu0
      %v506 = vadd.f32 0.0, %v505
      %v507 = vpop.f32.mrb[0].mxu0
      %508 = vmatprep.mubr.f32.mxu0 %v339
      %509 = vmatmul.mubr.f32.gmra.mrb[0].mxu0 %v338
      %v510 = vpop.f32.mrb[0].mxu0
      %v511 = vadd.f32 0.0, %v510
      %v512 = vpop.f32.mrb[0].mxu0
      %513 = vmatprep.mubr.f32.mxu0 %v341
      %514 = vmatmul.mubr.f32.gmra.mrb[0].mxu0 %v340
      %v515 = vpop.f32.mrb[0].mxu0
      %v516 = vadd.f32 0.0, %v515
      %v517 = vpop.f32.mrb[0].mxu0
      %518 = vdwg.mxu0
      %v519 = vadd.f32 %v294, %v441
      %v520 = vadd.f32 %v295, %v446
      %v521 = vadd.f32 %v296, %v451
      %v522 = vadd.f32 %v297, %v456
      %v523 = vadd.f32 %v298, %v461
      %v524 = vadd.f32 %v299, %v466
      %v525 = vadd.f32 %v300, %v471
      %v526 = vadd.f32 %v301, %v476
      %v527 = vadd.f32 %v302, %v481
      %v528 = vadd.f32 %v303, %v486
      %v529 = vadd.f32 %v304, %v491
      %v530 = vadd.f32 %v305, %v496
      %v531 = vadd.f32 %v306, %v501
      %v532 = vadd.f32 %v307, %v506
      %v533 = vadd.f32 %v308, %v511
      %v534 = vadd.f32 %v309, %v516
      %535 = vst [vmem:[#allocation2] sm:$0xff] %v519
      %536 = vst [vmem:[#allocation2 + $0x8] sm:$0xff] %v520
      %537 = vst [vmem:[#allocation2 + $0x10] sm:$0xff] %v521
      %538 = vst [vmem:[#allocation2 + $0x18] sm:$0xff] %v522
      %539 = vst [vmem:[#allocation2 + $0x20] sm:$0xff] %v523
      %540 = vst [vmem:[#allocation2 + $0x28] sm:$0xff] %v524
      %541 = vst [vmem:[#allocation2 + $0x30] sm:$0xff] %v525
      %542 = vst [vmem:[#allocation2 + $0x38] sm:$0xff] %v526
      %543 = vst [vmem:[#allocation2 + $0x40] sm:$0xff] %v527
      %544 = vst [vmem:[#allocation2 + $0x48] sm:$0xff] %v528
      %545 = vst [vmem:[#allocation2 + $0x50] sm:$0xff] %v529
      %546 = vst [vmem:[#allocation2 + $0x58] sm:$0xff] %v530
      %547 = vst [vmem:[#allocation2 + $0x60] sm:$0xff] %v531
      %548 = vst [vmem:[#allocation2 + $0x68] sm:$0xff] %v532
      %549 = vst [vmem:[#allocation2 + $0x70] sm:$0xff] %v533
      %550 = vst [vmem:[#allocation2 + $0x78] sm:$0xff] %v534
      // Predicated region
      $region37: #{gcn_forward.3} parent=31 // pred_check
        %p551 = pneg %p267
      $region38: #{gcn_forward.3} parent=31 // pred_check_branch
        %553 = sbr.rel (%p551) target = $region40
      $region39: #{gcn_forward.3} parent=31 // pred_region
        %v554 = vld [vmem:[#allocation2] sm:$0xff]
        %v555 = vld [vmem:[#allocation2 + $0x8] sm:$0xff]
        %v556 = vld [vmem:[#allocation2 + $0x10] sm:$0xff]
        %v557 = vld [vmem:[#allocation2 + $0x18] sm:$0xff]
        %v558 = vld [vmem:[#allocation2 + $0x20] sm:$0xff]
        %v559 = vld [vmem:[#allocation2 + $0x28] sm:$0xff]
        %v560 = vld [vmem:[#allocation2 + $0x30] sm:$0xff]
        %v561 = vld [vmem:[#allocation2 + $0x38] sm:$0xff]
        %v562 = vld [vmem:[#allocation2 + $0x40] sm:$0xff]
        %v563 = vld [vmem:[#allocation2 + $0x48] sm:$0xff]
        %v564 = vld [vmem:[#allocation2 + $0x50] sm:$0xff]
        %v565 = vld [vmem:[#allocation2 + $0x58] sm:$0xff]
        %v566 = vld [vmem:[#allocation2 + $0x60] sm:$0xff]
        %v567 = vld [vmem:[#allocation2 + $0x68] sm:$0xff]
        %v568 = vld [vmem:[#allocation2 + $0x70] sm:$0xff]
        %v569 = vld [vmem:[#allocation2 + $0x78] sm:$0xff]
        %570 = vst [vmem:[%s265] sm:$0xff] %v554
        %571 = vst [vmem:[%s265 + $0x8] sm:$0xff] %v555
        %572 = vst [vmem:[%s265 + $0x10] sm:$0xff] %v556
        %573 = vst [vmem:[%s265 + $0x18] sm:$0xff] %v557
        %574 = vst [vmem:[%s265 + $0x20] sm:$0xff] %v558
        %575 = vst [vmem:[%s265 + $0x28] sm:$0xff] %v559
        %576 = vst [vmem:[%s265 + $0x30] sm:$0xff] %v560
        %577 = vst [vmem:[%s265 + $0x38] sm:$0xff] %v561
        %578 = vst [vmem:[%s265 + $0x40] sm:$0xff] %v562
        %579 = vst [vmem:[%s265 + $0x48] sm:$0xff] %v563
        %580 = vst [vmem:[%s265 + $0x50] sm:$0xff] %v564
        %581 = vst [vmem:[%s265 + $0x58] sm:$0xff] %v565
        %582 = vst [vmem:[%s265 + $0x60] sm:$0xff] %v566
        %583 = vst [vmem:[%s265 + $0x68] sm:$0xff] %v567
        %584 = vst [vmem:[%s265 + $0x70] sm:$0xff] %v568
        %585 = vst [vmem:[%s265 + $0x78] sm:$0xff] %v569
      $region40: #{gcn_forward.3} parent=31 // pred_fallthru
        _
      %s586 = smul.u32 16, %s19
      %p587 = scmp.lt.s32.totalorder %s586, 31
      %s588 = scalar_select %p587, %s586, 31
      %p589 = scmp.lt.s32.totalorder %s20, 0
      %s590 = scalar_select %p589, %s20, 0
      %s591 = sadd.s32 %s590, %s588
      %s592 = smul.addr %s591, 8
      %s593 = scalar_lea.vmem %s3, %s592
      // Predicated region
      $region41: #{gcn_forward.3} parent=31 // pred_check
        %p594 = pneg %p135
      $region42: #{gcn_forward.3} parent=31 // pred_check_branch
        %596 = sbr.rel (%p594) target = $region44
      $region43: #{gcn_forward.3} parent=31 // pred_region
        %s597 = smul.u32 16, %s19
      $region44: #{gcn_forward.3} parent=31 // pred_fallthru
        _
    $region32: #{gcn_forward.3} parent=5 // pred_fallthru
      _
    %p598 = scmp.le.s32.totalorder 2, %s9
    // Predicated region
    $region45: #{gcn_forward.3} parent=5 // pred_check
      %p599 = pneg %p598
    $region46: #{gcn_forward.3} parent=5 // pred_check_branch
      %601 = sbr.rel (%p599) target = $region48
    $region47: #{gcn_forward.3} parent=5 // pred_region
      %s602 = ssub.s32 %s9, 2
      // Predicated region
      $region49: #{gcn_forward.3} parent=47 // pred_check
        %p603 = pneg %p141
      $region50: #{gcn_forward.3} parent=47 // pred_check_branch
        %605 = sbr.rel (%p603) target = $region52
      $region51: #{gcn_forward.3} parent=47 // pred_region
        %s606 = smul.u32 16, %s22
        %p607 = scmp.lt.s32.totalorder %s606, 31
        %s608 = scalar_select %p607, %s606, 31
        %p609 = scmp.lt.s32.totalorder %s23, 0
        %s610 = scalar_select %p609, %s23, 0
        %s611 = sadd.s32 %s610, %s608
        %s612 = smul.addr %s611, 8
        %s613 = scalar_lea.vmem %s3, %s612
      $region52: #{gcn_forward.3} parent=47 // pred_fallthru
        _
    $region48: #{gcn_forward.3} parent=5 // pred_fallthru
      _
  $region6: #{gcn_forward.3} parent=0 // loop_footer
    %s13 = sadd.s32 1, %s9
  $region7: #{gcn_forward.3} parent=0 // loop_footer_branch
    %8 = sbr.rel target = $region3
  $region8: #{gcn_forward.3} parent=0 // loop_exit
    _

// kernel: gcn_forward.2
$region0: #{gcn_forward.2}
  #allocation0 [shape = 'u32[]', space=smem, size = 0x4, offset = 0x4, fixed_abs, tag = 'smem constant byte address 0x4 - core index']
  #allocation1 [shape = 'u32[144,128]{1,0:T(1,128)}', space=vmem, size = 0x12000, scoped, tag = 'internal scratch']
  #allocation2 [shape = 'f32[128,128]{1,0:T(8,128)}', space=vmem, size = 0x10000, scoped, tag = 'scratch operand']
  %s0 = inlined_call_operand.vmem [shape: f32[256,128], index: 0, kind: input, shape index: {}]
  %s1 = inlined_call_operand.vmem [shape: f32[128,128], index: 1, kind: input, shape index: {}]
  %s2 = inlined_call_operand.vmem [shape: f32[256,128], index: 2, kind: output, shape index: {}]
  %s3 = sld [smem:[#allocation0]]
  $region49: #{gcn_forward.2} parent=0
    _
  %s5 = ssub.s32 1, %s3
  %s6 = scalar_select 0, %s5, %s3
  loop: start=0, step=1, limit=4
  $region2: #{gcn_forward.2} parent=0 // loop_pre_header
    _
  $region3: #{gcn_forward.2} parent=0 // loop_header
    %s8 = sphi 0, %s12
    %p9 = scmp.ge.s32.totalorder %s8, 4
    %s15 = sphi 0, %s34
    %s16 = sphi 0, %s30
    %s17 = sphi 0, %s26
    %s18 = sphi 0, %s15
    %s19 = sphi 0, %s16
    %s20 = sphi 0, %s17
    %s21 = sphi 0, %s18
    %s22 = sphi 0, %s19
    %s23 = sphi 0, %s20
    %s39 = sphi 0, %s41
    %s42 = sphi 0, %s39
    %s43 = sphi 0, %s42
    %s59 = sphi 0, %s43
    %s67 = sphi 0, %s69
    %s70 = sphi 0, %s67
    %s71 = sphi 0, %s70
    %s87 = sphi 0, %s71
    %s95 = sphi 0, %s97
    %s98 = sphi 0, %s95
    %s99 = sphi 0, %s98
    %s115 = sphi 0, %s99
  $region4: #{gcn_forward.2} parent=0 // loop_header_branch
    %11 = sbr.rel (%p9) target = $region8
  $region5: #{gcn_forward.2} parent=0 // loop_body
    %s13 = ssub.s32 %s8, 1
    %s14 = ssub.s32 %s8, 2
    %s24 = sadd.s32 1, %s17
    %p25 = scmp.ge.s32.totalorder %s24, 1
    %s26 = scalar_select %p25, 0, %s24
    %s27 = sadd.s32 1, %s16
    %s28 = scalar_select %p25, %s27, %s16
    %p29 = scmp.ge.s32.totalorder %s28, 1
    %s30 = scalar_select %p29, 0, %s28
    %s31 = sadd.s32 1, %s15
    %s32 = scalar_select %p29, %s31, %s15
    %p33 = scmp.ge.s32.totalorder %s32, 2
    %s34 = scalar_select %p33, 0, %s32
    %s35 = ssub.s32 %s15, %s34
    %s36 = ssub.s32 %s17, %s26
    %s37 = sor.u32 %s35, %s36
    %p38 = scmp.eq.s32.totalorder %s37, 0
    %s40 = sadd.s32 %s39, 1
    %s41 = scalar_select %p38, %s39, %s40
    %p44 = pneg %p38
    %p45 = scmp.eq.s32.totalorder %s8, 1
    %p46 = por %p44, %p45
    %p47 = scmp.ne.s32.totalorder %s39, %s42
    %p48 = scmp.eq.s32.totalorder %s8, 0
    %p49 = por %p47, %p48
    %p50 = scmp.ne.s32.totalorder %s39, %s42
    %p51 = scmp.eq.s32.totalorder %s13, 1
    %p52 = por %p50, %p51
    %p53 = scmp.ne.s32.totalorder %s42, %s43
    %p54 = scmp.eq.s32.totalorder %s13, 0
    %p55 = por %p53, %p54
    %p56 = scmp.ne.s32.totalorder %s42, %s43
    %p57 = scmp.eq.s32.totalorder %s14, 1
    %p58 = por %p56, %p57
    %p60 = scmp.ne.s32.totalorder %s43, %s59
    %p61 = scmp.eq.s32.totalorder %s14, 0
    %p62 = por %p60, %p61
    %s63 = ssub.s32 %s17, %s26
    %s64 = ssub.s32 %s16, %s30
    %s65 = sor.u32 %s63, %s64
    %p66 = scmp.eq.s32.totalorder %s65, 0
    %s68 = sadd.s32 %s67, 1
    %s69 = scalar_select %p66, %s67, %s68
    %p72 = pneg %p66
    %p73 = scmp.eq.s32.totalorder %s8, 1
    %p74 = por %p72, %p73
    %p75 = scmp.ne.s32.totalorder %s67, %s70
    %p76 = scmp.eq.s32.totalorder %s8, 0
    %p77 = por %p75, %p76
    %p78 = scmp.ne.s32.totalorder %s67, %s70
    %p79 = scmp.eq.s32.totalorder %s13, 1
    %p80 = por %p78, %p79
    %p81 = scmp.ne.s32.totalorder %s70, %s71
    %p82 = scmp.eq.s32.totalorder %s13, 0
    %p83 = por %p81, %p82
    %p84 = scmp.ne.s32.totalorder %s70, %s71
    %p85 = scmp.eq.s32.totalorder %s14, 1
    %p86 = por %p84, %p85
    %p88 = scmp.ne.s32.totalorder %s71, %s87
    %p89 = scmp.eq.s32.totalorder %s14, 0
    %p90 = por %p88, %p89
    %s91 = ssub.s32 %s15, %s34
    %s92 = ssub.s32 %s16, %s30
    %s93 = sor.u32 %s91, %s92
    %p94 = scmp.eq.s32.totalorder %s93, 0
    %s96 = sadd.s32 %s95, 1
    %s97 = scalar_select %p94, %s95, %s96
    %p100 = pneg %p94
    %p101 = scmp.eq.s32.totalorder %s8, 1
    %p102 = por %p100, %p101
    %p103 = scmp.ne.s32.totalorder %s95, %s98
    %p104 = scmp.eq.s32.totalorder %s8, 0
    %p105 = por %p103, %p104
    %p106 = scmp.ne.s32.totalorder %s95, %s98
    %p107 = scmp.eq.s32.totalorder %s13, 1
    %p108 = por %p106, %p107
    %p109 = scmp.ne.s32.totalorder %s98, %s99
    %p110 = scmp.eq.s32.totalorder %s13, 0
    %p111 = por %p109, %p110
    %p112 = scmp.ne.s32.totalorder %s98, %s99
    %p113 = scmp.eq.s32.totalorder %s14, 1
    %p114 = por %p112, %p113
    %p116 = scmp.ne.s32.totalorder %s99, %s115
    %p117 = scmp.eq.s32.totalorder %s14, 0
    %p118 = por %p116, %p117
    %p119 = scmp.le.s32.totalorder 1, %s8
    %p120 = scmp.lt.s32.totalorder %s8, 3
    %p121 = pnand %p119, %p120
    %p122 = pneg %p121
    // Predicated region
    $region9: #{gcn_forward.2} parent=5 // pred_check
      _
    $region10: #{gcn_forward.2} parent=5 // pred_check_branch
      %124 = sbr.rel (%p121) target = $region12
    $region11: #{gcn_forward.2} parent=5 // pred_region
      %s125 = ssub.s32 %s8, 1
      // Predicated region
      $region13: #{gcn_forward.2} parent=11 // pred_check
        %p126 = pneg %p83
      $region14: #{gcn_forward.2} parent=11 // pred_check_branch
        %128 = sbr.rel (%p126) target = $region16
      $region15: #{gcn_forward.2} parent=11 // pred_region
        %s129 = smul.u32 16, %s20
        %p130 = scmp.lt.s32.totalorder %s129, 15
        %s131 = scalar_select %p130, %s129, 15
        %p132 = scmp.lt.s32.totalorder %s19, 0
        %s133 = scalar_select %p132, %s19, 0
        %s134 = sadd.s32 %s133, %s131
        %s135 = smul.addr %s134, 8
        %s136 = scalar_lea.vmem %s1, %s135
        %s137 = smul.u32 16, %s20
      $region16: #{gcn_forward.2} parent=11 // pred_fallthru
        _
    $region12: #{gcn_forward.2} parent=5 // pred_fallthru
      _
    %p138 = scmp.lt.s32.totalorder %s8, 2
    // Predicated region
    $region17: #{gcn_forward.2} parent=5 // pred_check
      %p139 = pneg %p138
    $region18: #{gcn_forward.2} parent=5 // pred_check_branch
      %141 = sbr.rel (%p139) target = $region20
    $region19: #{gcn_forward.2} parent=5 // pred_region
      // Predicated region
      $region21: #{gcn_forward.2} parent=19 // pred_check
        %p142 = pneg %p49
      $region22: #{gcn_forward.2} parent=19 // pred_check_branch
        %144 = sbr.rel (%p142) target = $region24
      $region23: #{gcn_forward.2} parent=19 // pred_region
        %s145 = smul.u32 16, %s15
        %p146 = scmp.lt.s32.totalorder %s145, 31
        %s147 = scalar_select %p146, %s145, 31
        %p148 = scmp.lt.s32.totalorder %s17, 0
        %s149 = scalar_select %p148, %s17, 0
        %s150 = sadd.s32 %s149, %s147
        %s151 = smul.addr %s150, 8
        %s152 = scalar_lea.vmem %s0, %s151
        %s153 = smul.u32 16, %s15
      $region24: #{gcn_forward.2} parent=19 // pred_fallthru
        _
    $region20: #{gcn_forward.2} parent=5 // pred_fallthru
      _
    %p154 = scmp.le.s32.totalorder 1, %s8
    %p155 = scmp.lt.s32.totalorder %s8, 3
    %p156 = pnand %p154, %p155
    %p157 = pneg %p156
    // Predicated region
    $region25: #{gcn_forward.2} parent=5 // pred_check
      _
    $region26: #{gcn_forward.2} parent=5 // pred_check_branch
      %159 = sbr.rel (%p156) target = $region28
    $region27: #{gcn_forward.2} parent=5 // pred_region
      %s160 = ssub.s32 %s8, 1
      %s161 = smul.u32 16, %s18
      %p162 = scmp.lt.s32.totalorder %s161, 31
      %s163 = scalar_select %p162, %s161, 31
      %p164 = scmp.lt.s32.totalorder %s20, 0
      %s165 = scalar_select %p164, %s20, 0
      %s166 = sadd.s32 %s165, %s163
      %s167 = smul.addr %s166, 8
      %s168 = scalar_lea.vmem %s0, %s167
      %p169 = pneg %p55
      %p170 = pneg %p52
      %s171 = smul.u32 16, %s20
      %p172 = scmp.lt.s32.totalorder %s171, 15
      %s173 = scalar_select %p172, %s171, 15
      %p174 = scmp.lt.s32.totalorder %s19, 0
      %s175 = scalar_select %p174, %s19, 0
      %s176 = sadd.s32 %s175, %s173
      %s177 = smul.addr %s176, 8
      %s178 = scalar_lea.vmem %s1, %s177
      %p179 = pneg %p83
      %p180 = pneg %p80
      %p181 = pneg %p111
      %p182 = pneg %p108
      %s183 = smul.u32 16, %s18
      %p184 = scmp.lt.s32.totalorder %s183, 31
      %s185 = scalar_select %p184, %s183, 31
      %p186 = scmp.lt.s32.totalorder %s19, 0
      %s187 = scalar_select %p186, %s19, 0
      %s188 = sadd.s32 %s187, %s185
      %s189 = smul.addr %s188, 8
      %s190 = scalar_lea.vmem %s2, %s189
      %s191 = smul.u32 16, %s18
      %p192 = scmp.lt.s32.totalorder %s191, 31
      %s193 = scalar_select %p192, %s191, 31
      %p194 = scmp.lt.s32.totalorder %s20, 0
      %s195 = scalar_select %p194, %s20, 0
      %s196 = sadd.s32 %s195, %s193
      %s197 = smul.addr %s196, 8
      %s198 = scalar_lea.vmem %s0, %s197
      %s199 = smul.u32 16, %s18
      %s200 = smul.u32 16, %s20
      %p201 = scmp.lt.s32.totalorder %s200, 15
      %s202 = scalar_select %p201, %s200, 15
      %p203 = scmp.lt.s32.totalorder %s19, 0
      %s204 = scalar_select %p203, %s19, 0
      %s205 = sadd.s32 %s204, %s202
      %s206 = smul.addr %s205, 8
      %s207 = scalar_lea.vmem %s1, %s206
      %s208 = smul.u32 16, %s20
      %s209 = smul.u32 16, %s18
      %p210 = scmp.lt.s32.totalorder %s209, 31
      %s211 = scalar_select %p210, %s209, 31
      %p212 = scmp.lt.s32.totalorder %s19, 0
      %s213 = scalar_select %p212, %s19, 0
      %s214 = sadd.s32 %s213, %s211
      %s215 = smul.addr %s214, 8
      %s216 = scalar_lea.vmem %s2, %s215
      %s217 = smul.u32 16, %s18
      %p218 = scmp.eq.s32.totalorder %s20, 0
      // Predicated region
      $region29: #{gcn_forward.2} parent=27 // pred_check
        %p219 = pneg %p218
      $region30: #{gcn_forward.2} parent=27 // pred_check_branch
        %221 = sbr.rel (%p219) target = $region32
      $region31: #{gcn_forward.2} parent=27 // pred_region
        %222 = vst [vmem:[#allocation2] sm:$0xff] 0.0
        %223 = vst [vmem:[#allocation2 + $0x8] sm:$0xff] 0.0
        %224 = vst [vmem:[#allocation2 + $0x10] sm:$0xff] 0.0
        %225 = vst [vmem:[#allocation2 + $0x18] sm:$0xff] 0.0
        %226 = vst [vmem:[#allocation2 + $0x20] sm:$0xff] 0.0
        %227 = vst [vmem:[#allocation2 + $0x28] sm:$0xff] 0.0
        %228 = vst [vmem:[#allocation2 + $0x30] sm:$0xff] 0.0
        %229 = vst [vmem:[#allocation2 + $0x38] sm:$0xff] 0.0
        %230 = vst [vmem:[#allocation2 + $0x40] sm:$0xff] 0.0
        %231 = vst [vmem:[#allocation2 + $0x48] sm:$0xff] 0.0
        %232 = vst [vmem:[#allocation2 + $0x50] sm:$0xff] 0.0
        %233 = vst [vmem:[#allocation2 + $0x58] sm:$0xff] 0.0
        %234 = vst [vmem:[#allocation2 + $0x60] sm:$0xff] 0.0
        %235 = vst [vmem:[#allocation2 + $0x68] sm:$0xff] 0.0
        %236 = vst [vmem:[#allocation2 + $0x70] sm:$0xff] 0.0
        %237 = vst [vmem:[#allocation2 + $0x78] sm:$0xff] 0.0
      $region32: #{gcn_forward.2} parent=27 // pred_fallthru
        _
      %v238 = vld [vmem:[#allocation2] sm:$0xff]
      %v239 = vld [vmem:[#allocation2 + $0x8] sm:$0xff]
      %v240 = vld [vmem:[#allocation2 + $0x10] sm:$0xff]
      %v241 = vld [vmem:[#allocation2 + $0x18] sm:$0xff]
      %v242 = vld [vmem:[#allocation2 + $0x20] sm:$0xff]
      %v243 = vld [vmem:[#allocation2 + $0x28] sm:$0xff]
      %v244 = vld [vmem:[#allocation2 + $0x30] sm:$0xff]
      %v245 = vld [vmem:[#allocation2 + $0x38] sm:$0xff]
      %v246 = vld [vmem:[#allocation2 + $0x40] sm:$0xff]
      %v247 = vld [vmem:[#allocation2 + $0x48] sm:$0xff]
      %v248 = vld [vmem:[#allocation2 + $0x50] sm:$0xff]
      %v249 = vld [vmem:[#allocation2 + $0x58] sm:$0xff]
      %v250 = vld [vmem:[#allocation2 + $0x60] sm:$0xff]
      %v251 = vld [vmem:[#allocation2 + $0x68] sm:$0xff]
      %v252 = vld [vmem:[#allocation2 + $0x70] sm:$0xff]
      %v253 = vld [vmem:[#allocation2 + $0x78] sm:$0xff]
      %v254 = vld [vmem:[%s198] sm:$0xff]
      %v255 = vld [vmem:[%s198 + $0x8] sm:$0xff]
      %v256 = vld [vmem:[%s198 + $0x10] sm:$0xff]
      %v257 = vld [vmem:[%s198 + $0x18] sm:$0xff]
      %v258 = vld [vmem:[%s198 + $0x20] sm:$0xff]
      %v259 = vld [vmem:[%s198 + $0x28] sm:$0xff]
      %v260 = vld [vmem:[%s198 + $0x30] sm:$0xff]
      %v261 = vld [vmem:[%s198 + $0x38] sm:$0xff]
      %v262 = vld [vmem:[%s198 + $0x40] sm:$0xff]
      %v263 = vld [vmem:[%s198 + $0x48] sm:$0xff]
      %v264 = vld [vmem:[%s198 + $0x50] sm:$0xff]
      %v265 = vld [vmem:[%s198 + $0x58] sm:$0xff]
      %v266 = vld [vmem:[%s198 + $0x60] sm:$0xff]
      %v267 = vld [vmem:[%s198 + $0x68] sm:$0xff]
      %v268 = vld [vmem:[%s198 + $0x70] sm:$0xff]
      %v269 = vld [vmem:[%s198 + $0x78] sm:$0xff]
      %v270 = vld [vmem:[%s207] sm:$0xff]
      %v271 = vld [vmem:[%s207 + $0x8] sm:$0xff]
      %v272 = vld [vmem:[%s207 + $0x10] sm:$0xff]
      %v273 = vld [vmem:[%s207 + $0x18] sm:$0xff]
      %v274 = vld [vmem:[%s207 + $0x20] sm:$0xff]
      %v275 = vld [vmem:[%s207 + $0x28] sm:$0xff]
      %v276 = vld [vmem:[%s207 + $0x30] sm:$0xff]
      %v277 = vld [vmem:[%s207 + $0x38] sm:$0xff]
      %v278 = vld [vmem:[%s207 + $0x40] sm:$0xff]
      %v279 = vld [vmem:[%s207 + $0x48] sm:$0xff]
      %v280 = vld [vmem:[%s207 + $0x50] sm:$0xff]
      %v281 = vld [vmem:[%s207 + $0x58] sm:$0xff]
      %v282 = vld [vmem:[%s207 + $0x60] sm:$0xff]
      %v283 = vld [vmem:[%s207 + $0x68] sm:$0xff]
      %v284 = vld [vmem:[%s207 + $0x70] sm:$0xff]
      %v285 = vld [vmem:[%s207 + $0x78] sm:$0xff]
      %286 = vmatprep.subr.mxu0 0.0
      %287 = vmatpush1.msra.mxu0 %v270
      %288 = vmatprep.subr.mxu0 0.0
      %289 = vmatpush1.msra.mxu0 %v271
      %290 = vmatprep.subr.mxu0 0.0
      %291 = vmatpush1.msra.mxu0 %v272
      %292 = vmatprep.subr.mxu0 0.0
      %293 = vmatpush1.msra.mxu0 %v273
      %294 = vmatprep.subr.mxu0 0.0
      %295 = vmatpush1.msra.mxu0 %v274
      %296 = vmatprep.subr.mxu0 0.0
      %297 = vmatpush1.msra.mxu0 %v275
      %298 = vmatprep.subr.mxu0 0.0
      %299 = vmatpush1.msra.mxu0 %v276
      %300 = vmatprep.subr.mxu0 0.0
      %301 = vmatpush1.msra.mxu0 %v277
      %302 = vmatprep.subr.mxu0 0.0
      %303 = vmatpush1.msra.mxu0 %v278
      %304 = vmatprep.subr.mxu0 0.0
      %305 = vmatpush1.msra.mxu0 %v279
      %306 = vmatprep.subr.mxu0 0.0
      %307 = vmatpush1.msra.mxu0 %v280
      %308 = vmatprep.subr.mxu0 0.0
      %309 = vmatpush1.msra.mxu0 %v281
      %310 = vmatprep.subr.mxu0 0.0
      %311 = vmatpush1.msra.mxu0 %v282
      %312 = vmatprep.subr.mxu0 0.0
      %313 = vmatpush1.msra.mxu0 %v283
      %314 = vmatprep.subr.mxu0 0.0
      %315 = vmatpush1.msra.mxu0 %v284
      %316 = vmatprep.subr.mxu0 0.0
      %317 = vmatpush1.msra.mxu0 %v285
      %318 = vmatprep.subr.mxu0 0.0
      %319 = vmatpush1.msra.mxu0 0.0
      %320 = vmatprep.subr.mxu0 0.0
      %321 = vmatpush1.msra.mxu0 0.0
      %322 = vmatprep.subr.mxu0 0.0
      %323 = vmatpush1.msra.mxu0 0.0
      %324 = vmatprep.subr.mxu0 0.0
      %325 = vmatpush1.msra.mxu0 0.0
      %326 = vmatprep.subr.mxu0 0.0
      %327 = vmatpush1.msra.mxu0 0.0
      %328 = vmatprep.subr.mxu0 0.0
      %329 = vmatpush1.msra.mxu0 0.0
      %330 = vmatprep.subr.mxu0 0.0
      %331 = vmatpush1.msra.mxu0 0.0
      %332 = vmatprep.subr.mxu0 0.0
      %333 = vmatpush1.msra.mxu0 0.0
      %334 = vmatprep.subr.mxu0 0.0
      %335 = vmatpush1.msra.mxu0 0.0
      %336 = vmatprep.subr.mxu0 0.0
      %337 = vmatpush1.msra.mxu0 0.0
      %338 = vmatprep.subr.mxu0 0.0
      %339 = vmatpush1.msra.mxu0 0.0
      %340 = vmatprep.subr.mxu0 0.0
      %341 = vmatpush1.msra.mxu0 0.0
      %342 = vmatprep.subr.mxu0 0.0
      %343 = vmatpush1.msra.mxu0 0.0
      %344 = vmatprep.subr.mxu0 0.0
      %345 = vmatpush1.msra.mxu0 0.0
      %346 = vmatprep.subr.mxu0 0.0
      %347 = vmatpush1.msra.mxu0 0.0
      %348 = vmatprep.subr.mxu0 0.0
      %349 = vmatpush1.msra.mxu0 0.0
      %350 = vmatprep.mubr.f32.mxu0 0.0
      %351 = vmatmul.mubr.f32.gmra.mrb[0].mxu0 %v254
      %v352 = vpop.f32.mrb[0].mxu0
      %v353 = vadd.f32 0.0, %v352
      %v354 = vpop.f32.mrb[0].mxu0
      %355 = vmatprep.mubr.f32.mxu0 0.0
      %356 = vmatmul.mubr.f32.gmra.mrb[0].mxu0 %v255
      %v357 = vpop.f32.mrb[0].mxu0
      %v358 = vadd.f32 0.0, %v357
      %v359 = vpop.f32.mrb[0].mxu0
      %360 = vmatprep.mubr.f32.mxu0 0.0
      %361 = vmatmul.mubr.f32.gmra.mrb[0].mxu0 %v256
      %v362 = vpop.f32.mrb[0].mxu0
      %v363 = vadd.f32 0.0, %v362
      %v364 = vpop.f32.mrb[0].mxu0
      %365 = vmatprep.mubr.f32.mxu0 0.0
      %366 = vmatmul.mubr.f32.gmra.mrb[0].mxu0 %v257
      %v367 = vpop.f32.mrb[0].mxu0
      %v368 = vadd.f32 0.0, %v367
      %v369 = vpop.f32.mrb[0].mxu0
      %370 = vmatprep.mubr.f32.mxu0 0.0
      %371 = vmatmul.mubr.f32.gmra.mrb[0].mxu0 %v258
      %v372 = vpop.f32.mrb[0].mxu0
      %v373 = vadd.f32 0.0, %v372
      %v374 = vpop.f32.mrb[0].mxu0
      %375 = vmatprep.mubr.f32.mxu0 0.0
      %376 = vmatmul.mubr.f32.gmra.mrb[0].mxu0 %v259
      %v377 = vpop.f32.mrb[0].mxu0
      %v378 = vadd.f32 0.0, %v377
      %v379 = vpop.f32.mrb[0].mxu0
      %380 = vmatprep.mubr.f32.mxu0 0.0
      %381 = vmatmul.mubr.f32.gmra.mrb[0].mxu0 %v260
      %v382 = vpop.f32.mrb[0].mxu0
      %v383 = vadd.f32 0.0, %v382
      %v384 = vpop.f32.mrb[0].mxu0
      %385 = vmatprep.mubr.f32.mxu0 0.0
      %386 = vmatmul.mubr.f32.gmra.mrb[0].mxu0 %v261
      %v387 = vpop.f32.mrb[0].mxu0
      %v388 = vadd.f32 0.0, %v387
      %v389 = vpop.f32.mrb[0].mxu0
      %390 = vmatprep.mubr.f32.mxu0 0.0
      %391 = vmatmul.mubr.f32.gmra.mrb[0].mxu0 %v262
      %v392 = vpop.f32.mrb[0].mxu0
      %v393 = vadd.f32 0.0, %v392
      %v394 = vpop.f32.mrb[0].mxu0
      %395 = vmatprep.mubr.f32.mxu0 0.0
      %396 = vmatmul.mubr.f32.gmra.mrb[0].mxu0 %v263
      %v397 = vpop.f32.mrb[0].mxu0
      %v398 = vadd.f32 0.0, %v397
      %v399 = vpop.f32.mrb[0].mxu0
      %400 = vmatprep.mubr.f32.mxu0 0.0
      %401 = vmatmul.mubr.f32.gmra.mrb[0].mxu0 %v264
      %v402 = vpop.f32.mrb[0].mxu0
      %v403 = vadd.f32 0.0, %v402
      %v404 = vpop.f32.mrb[0].mxu0
      %405 = vmatprep.mubr.f32.mxu0 0.0
      %406 = vmatmul.mubr.f32.gmra.mrb[0].mxu0 %v265
      %v407 = vpop.f32.mrb[0].mxu0
      %v408 = vadd.f32 0.0, %v407
      %v409 = vpop.f32.mrb[0].mxu0
      %410 = vmatprep.mubr.f32.mxu0 0.0
      %411 = vmatmul.mubr.f32.gmra.mrb[0].mxu0 %v266
      %v412 = vpop.f32.mrb[0].mxu0
      %v413 = vadd.f32 0.0, %v412
      %v414 = vpop.f32.mrb[0].mxu0
      %415 = vmatprep.mubr.f32.mxu0 0.0
      %416 = vmatmul.mubr.f32.gmra.mrb[0].mxu0 %v267
      %v417 = vpop.f32.mrb[0].mxu0
      %v418 = vadd.f32 0.0, %v417
      %v419 = vpop.f32.mrb[0].mxu0
      %420 = vmatprep.mubr.f32.mxu0 0.0
      %421 = vmatmul.mubr.f32.gmra.mrb[0].mxu0 %v268
      %v422 = vpop.f32.mrb[0].mxu0
      %v423 = vadd.f32 0.0, %v422
      %v424 = vpop.f32.mrb[0].mxu0
      %425 = vmatprep.mubr.f32.mxu0 0.0
      %426 = vmatmul.mubr.f32.gmra.mrb[0].mxu0 %v269
      %v427 = vpop.f32.mrb[0].mxu0
      %v428 = vadd.f32 0.0, %v427
      %v429 = vpop.f32.mrb[0].mxu0
      %430 = vdwg.mxu0
      %v431 = vadd.f32 %v238, %v353
      %v432 = vadd.f32 %v239, %v358
      %v433 = vadd.f32 %v240, %v363
      %v434 = vadd.f32 %v241, %v368
      %v435 = vadd.f32 %v242, %v373
      %v436 = vadd.f32 %v243, %v378
      %v437 = vadd.f32 %v244, %v383
      %v438 = vadd.f32 %v245, %v388
      %v439 = vadd.f32 %v246, %v393
      %v440 = vadd.f32 %v247, %v398
      %v441 = vadd.f32 %v248, %v403
      %v442 = vadd.f32 %v249, %v408
      %v443 = vadd.f32 %v250, %v413
      %v444 = vadd.f32 %v251, %v418
      %v445 = vadd.f32 %v252, %v423
      %v446 = vadd.f32 %v253, %v428
      %447 = vst [vmem:[#allocation2] sm:$0xff] %v431
      %448 = vst [vmem:[#allocation2 + $0x8] sm:$0xff] %v432
      %449 = vst [vmem:[#allocation2 + $0x10] sm:$0xff] %v433
      %450 = vst [vmem:[#allocation2 + $0x18] sm:$0xff] %v434
      %451 = vst [vmem:[#allocation2 + $0x20] sm:$0xff] %v435
      %452 = vst [vmem:[#allocation2 + $0x28] sm:$0xff] %v436
      %453 = vst [vmem:[#allocation2 + $0x30] sm:$0xff] %v437
      %454 = vst [vmem:[#allocation2 + $0x38] sm:$0xff] %v438
      %455 = vst [vmem:[#allocation2 + $0x40] sm:$0xff] %v439
      %456 = vst [vmem:[#allocation2 + $0x48] sm:$0xff] %v440
      %457 = vst [vmem:[#allocation2 + $0x50] sm:$0xff] %v441
      %458 = vst [vmem:[#allocation2 + $0x58] sm:$0xff] %v442
      %459 = vst [vmem:[#allocation2 + $0x60] sm:$0xff] %v443
      %460 = vst [vmem:[#allocation2 + $0x68] sm:$0xff] %v444
      %461 = vst [vmem:[#allocation2 + $0x70] sm:$0xff] %v445
      %462 = vst [vmem:[#allocation2 + $0x78] sm:$0xff] %v446
      // Predicated region
      $region33: #{gcn_forward.2} parent=27 // pred_check
        %p463 = pneg %p218
      $region34: #{gcn_forward.2} parent=27 // pred_check_branch
        %465 = sbr.rel (%p463) target = $region36
      $region35: #{gcn_forward.2} parent=27 // pred_region
        %v466 = vld [vmem:[#allocation2] sm:$0xff]
        %v467 = vld [vmem:[#allocation2 + $0x8] sm:$0xff]
        %v468 = vld [vmem:[#allocation2 + $0x10] sm:$0xff]
        %v469 = vld [vmem:[#allocation2 + $0x18] sm:$0xff]
        %v470 = vld [vmem:[#allocation2 + $0x20] sm:$0xff]
        %v471 = vld [vmem:[#allocation2 + $0x28] sm:$0xff]
        %v472 = vld [vmem:[#allocation2 + $0x30] sm:$0xff]
        %v473 = vld [vmem:[#allocation2 + $0x38] sm:$0xff]
        %v474 = vld [vmem:[#allocation2 + $0x40] sm:$0xff]
        %v475 = vld [vmem:[#allocation2 + $0x48] sm:$0xff]
        %v476 = vld [vmem:[#allocation2 + $0x50] sm:$0xff]
        %v477 = vld [vmem:[#allocation2 + $0x58] sm:$0xff]
        %v478 = vld [vmem:[#allocation2 + $0x60] sm:$0xff]
        %v479 = vld [vmem:[#allocation2 + $0x68] sm:$0xff]
        %v480 = vld [vmem:[#allocation2 + $0x70] sm:$0xff]
        %v481 = vld [vmem:[#allocation2 + $0x78] sm:$0xff]
        %482 = vst [vmem:[%s216] sm:$0xff] %v466
        %483 = vst [vmem:[%s216 + $0x8] sm:$0xff] %v467
        %484 = vst [vmem:[%s216 + $0x10] sm:$0xff] %v468
        %485 = vst [vmem:[%s216 + $0x18] sm:$0xff] %v469
        %486 = vst [vmem:[%s216 + $0x20] sm:$0xff] %v470
        %487 = vst [vmem:[%s216 + $0x28] sm:$0xff] %v471
        %488 = vst [vmem:[%s216 + $0x30] sm:$0xff] %v472
        %489 = vst [vmem:[%s216 + $0x38] sm:$0xff] %v473
        %490 = vst [vmem:[%s216 + $0x40] sm:$0xff] %v474
        %491 = vst [vmem:[%s216 + $0x48] sm:$0xff] %v475
        %492 = vst [vmem:[%s216 + $0x50] sm:$0xff] %v476
        %493 = vst [vmem:[%s216 + $0x58] sm:$0xff] %v477
        %494 = vst [vmem:[%s216 + $0x60] sm:$0xff] %v478
        %495 = vst [vmem:[%s216 + $0x68] sm:$0xff] %v479
        %496 = vst [vmem:[%s216 + $0x70] sm:$0xff] %v480
        %497 = vst [vmem:[%s216 + $0x78] sm:$0xff] %v481
      $region36: #{gcn_forward.2} parent=27 // pred_fallthru
        _
      %s498 = smul.u32 16, %s18
      %p499 = scmp.lt.s32.totalorder %s498, 31
      %s500 = scalar_select %p499, %s498, 31
      %p501 = scmp.lt.s32.totalorder %s19, 0
      %s502 = scalar_select %p501, %s19, 0
      %s503 = sadd.s32 %s502, %s500
      %s504 = smul.addr %s503, 8
      %s505 = scalar_lea.vmem %s2, %s504
      // Predicated region
      $region37: #{gcn_forward.2} parent=27 // pred_check
        %p506 = pneg %p108
      $region38: #{gcn_forward.2} parent=27 // pred_check_branch
        %508 = sbr.rel (%p506) target = $region40
      $region39: #{gcn_forward.2} parent=27 // pred_region
        %s509 = smul.u32 16, %s18
      $region40: #{gcn_forward.2} parent=27 // pred_fallthru
        _
    $region28: #{gcn_forward.2} parent=5 // pred_fallthru
      _
    %p510 = scmp.le.s32.totalorder 2, %s8
    // Predicated region
    $region41: #{gcn_forward.2} parent=5 // pred_check
      %p511 = pneg %p510
    $region42: #{gcn_forward.2} parent=5 // pred_check_branch
      %513 = sbr.rel (%p511) target = $region44
    $region43: #{gcn_forward.2} parent=5 // pred_region
      %s514 = ssub.s32 %s8, 2
      // Predicated region
      $region45: #{gcn_forward.2} parent=43 // pred_check
        %p515 = pneg %p114
      $region46: #{gcn_forward.2} parent=43 // pred_check_branch
        %517 = sbr.rel (%p515) target = $region48
      $region47: #{gcn_forward.2} parent=43 // pred_region
        %s518 = smul.u32 16, %s21
        %p519 = scmp.lt.s32.totalorder %s518, 31
        %s520 = scalar_select %p519, %s518, 31
        %p521 = scmp.lt.s32.totalorder %s22, 0
        %s522 = scalar_select %p521, %s22, 0
        %s523 = sadd.s32 %s522, %s520
        %s524 = smul.addr %s523, 8
        %s525 = scalar_lea.vmem %s2, %s524
      $region48: #{gcn_forward.2} parent=43 // pred_fallthru
        _
    $region44: #{gcn_forward.2} parent=5 // pred_fallthru
      _
  $region6: #{gcn_forward.2} parent=0 // loop_footer
    %s12 = sadd.s32 1, %s8
  $region7: #{gcn_forward.2} parent=0 // loop_footer_branch
    %7 = sbr.rel target = $region3
  $region8: #{gcn_forward.2} parent=0 // loop_exit
    _

</llo_original>
